<compile_context>
chip_gen: v5e
topology: v5e:2x2
jax: 0.10.0
libtpu: 0.0.40
codegen_flags: <defaults>
</compile_context>

<pallas_src>
import functools
import numpy as np
import jax
import jax.numpy as jnp
from jax.experimental import pallas as pl
from jax.experimental.pallas import tpu as pltpu


# ----------------------------- Pallas kernel -------------------------------

def _gap_kernel(x_ref, o_ref, acc_ref, *, inv_hw):
    """Global average pool over the flattened spatial (lane) axis.

    grid = (B, HW // THW); the HW axis is a reduction ("arbitrary"):
      s == 0      : zero the f32 accumulator
      every s     : acc += sum(x_tile, axis=-1)
      s == last   : out = acc * (1 / HW)
    """
    s = pl.program_id(1)

    @pl.when(s == 0)
    def _():
        acc_ref[...] = jnp.zeros_like(acc_ref)

    x = x_ref[...].astype(jnp.float32)                     # (C, THW)
    acc_ref[...] += jnp.sum(x, axis=1, keepdims=True)      # (C, 1) partial sum

    @pl.when(s == pl.num_programs(1) - 1)
    def _():
        o_ref[...] = (acc_ref[...] * inv_hw).astype(o_ref.dtype)


# ------------------------------- wrapper ------------------------------------

def _pick_hw_tile(hw, c, itemsize, max_lane_tile=None, vmem_budget=8 << 20):
    """Largest multiple-of-128 divisor of hw whose double-buffered block fits
    the VMEM budget; if hw is not a multiple of 128, use the full extent
    (a full-array last dim is always a legal block)."""
    if hw % 128 != 0:
        return hw
    cap = max(128, (vmem_budget // max(1, 2 * c * itemsize)) // 128 * 128)
    if max_lane_tile is not None:
        cap = max(128, min(cap, (max_lane_tile // 128) * 128))
    best, t = 128, 128
    while t <= min(hw, cap):
        if hw % t == 0:
            best = t
        t += 128
    return best


def global_avg_pool2d(x, *, max_lane_tile=None):
    """x: (B, C, H, W)  ->  (B, C), equal to x.view(B, C, -1).mean(dim=2)."""
    B, C, H, W = x.shape
    HW = H * W
    xf = x.reshape(B, C, HW)
    THW = _pick_hw_tile(HW, C, xf.dtype.itemsize, max_lane_tile)
    grid = (B, HW // THW)

    kernel = functools.partial(_gap_kernel, inv_hw=1.0 / HW)
    out = pl.pallas_call(
        kernel,
        out_shape=jax.ShapeDtypeStruct((B, C, 1), x.dtype),
        grid=grid,
        in_specs=[
            pl.BlockSpec((None, C, THW), lambda b, s: (b, 0, s)),
        ],
        out_specs=pl.BlockSpec((None, C, 1), lambda b, s: (b, 0, 0)),
        scratch_shapes=[pltpu.VMEM((C, 1), jnp.float32)],
        compiler_params=pltpu.CompilerParams(
            dimension_semantics=("parallel", "arbitrary")),
    )(xf)
    return out[:, :, 0]


# ---------------------------------- main -------------------------------------

if __name__ == "__main__":
    key = jax.random.PRNGKey(0)
    x = jax.random.normal(key, (2, 4, 16, 16), jnp.float32)

    fwd = jax.jit(global_avg_pool2d)
    out = jax.block_until_ready(fwd(x))
    ref = jnp.mean(x.reshape(2, 4, -1), axis=2)
    np.testing.assert_allclose(np.asarray(out), np.asarray(ref),
                               rtol=1e-5, atol=1e-5)

    # Exercise the multi-tile accumulated-GAP path (forces 2 HW tiles of 128).
    fwd_tiled = jax.jit(functools.partial(global_avg_pool2d, max_lane_tile=128))
    out2 = jax.block_until_ready(fwd_tiled(x))
    np.testing.assert_allclose(np.asarray(out2), np.asarray(ref),
                               rtol=1e-5, atol=1e-5)

    # Non-128-multiple spatial extent (full-extent lane block path).
    x2 = jax.random.normal(jax.random.PRNGKey(1), (2, 8, 7, 7), jnp.float32)
    out3 = jax.block_until_ready(jax.jit(global_avg_pool2d)(x2))
    ref3 = jnp.mean(x2.reshape(2, 8, -1), axis=2)
    np.testing.assert_allclose(np.asarray(out3), np.asarray(ref3),
                               rtol=1e-5, atol=1e-5)

    print("KERNEL_OK")
</pallas_src>

<mosaic_0001>
module attributes {stable_mosaic.version = 11 : i64} {
  func.func @_gap_kernel(%arg0: i32, %arg1: i32, %arg2: memref<1x4x256xf32, #tpu.memory_space<vmem>>, %arg3: memref<1x4x1xf32, #tpu.memory_space<vmem>>, %arg4: memref<4x1xf32, #tpu.memory_space<vmem>>) attributes {dimension_semantics = [#tpu.dimension_semantics<parallel>, #tpu.dimension_semantics<arbitrary>], iteration_bounds = array<i64: 2, 1>, scalar_prefetch = 0 : i64, scratch_operands = 1 : i64, tpu.core_type = #tpu.core_type<tc>, window_params = [{transform_indices = @transform_0, window_bounds = array<i64: 1, 4, 256>}, {transform_indices = @transform_1, window_bounds = array<i64: 1, 4, 1>}]} {
    %c0_i32 = arith.constant 0 : i32
    %0 = arith.cmpi eq, %arg1, %c0_i32 : i32
    %1 = arith.extui %0 : i1 to i32
    %c0_i32_0 = arith.constant 0 : i32
    %2 = arith.cmpi ne, %1, %c0_i32_0 : i32
    scf.if %2 {
      %cst_9 = arith.constant 0.000000e+00 : f32
      %13 = vector.broadcast %cst_9 : f32 to vector<4x1xf32>
      %c0_10 = arith.constant 0 : index
      %c0_11 = arith.constant 0 : index
      %14 = vector.load %arg4[%c0_10, %c0_11] : memref<4x1xf32, #tpu.memory_space<vmem>>, vector<4x1xf32>
      tpu.vector_store %arg4[%c0_10, %c0_11], %13 {strides = array<i32>} : memref<4x1xf32, #tpu.memory_space<vmem>>, vector<4x1xf32>,
    } else {
    }
    %c0 = arith.constant 0 : index
    %c0_1 = arith.constant 0 : index
    %c0_2 = arith.constant 0 : index
    %3 = vector.load %arg2[%c0, %c0_1, %c0_2] : memref<1x4x256xf32, #tpu.memory_space<vmem>>, vector<1x4x256xf32>
    %4 = vector.shape_cast %3 : vector<1x4x256xf32> to vector<4x256xf32>
    %c0_3 = arith.constant 0 : index
    %c0_4 = arith.constant 0 : index
    %5 = vector.load %arg4[%c0_3, %c0_4] : memref<4x1xf32, #tpu.memory_space<vmem>>, vector<4x1xf32>
    %cst = arith.constant dense<0.000000e+00> : vector<4xf32>
    %6 = vector.multi_reduction <add>, %4, %cst [1] : vector<4x256xf32> to vector<4xf32>
    %7 = vector.shape_cast %6 : vector<4xf32> to vector<4x1xf32>
    %8 = arith.addf %5, %7 : vector<4x1xf32>
    %c0_5 = arith.constant 0 : index
    %c0_6 = arith.constant 0 : index
    %9 = vector.load %arg4[%c0_5, %c0_6] : memref<4x1xf32, #tpu.memory_space<vmem>>, vector<4x1xf32>
    tpu.vector_store %arg4[%c0_5, %c0_6], %8 {strides = array<i32>} : memref<4x1xf32, #tpu.memory_space<vmem>>, vector<4x1xf32>,
    %c0_i32_7 = arith.constant 0 : i32
    %10 = arith.cmpi eq, %arg1, %c0_i32_7 : i32
    %11 = arith.extui %10 : i1 to i32
    %c0_i32_8 = arith.constant 0 : i32
    %12 = arith.cmpi ne, %11, %c0_i32_8 : i32
    scf.if %12 {
      %c0_9 = arith.constant 0 : index
      %c0_10 = arith.constant 0 : index
      %13 = vector.load %arg4[%c0_9, %c0_10] : memref<4x1xf32, #tpu.memory_space<vmem>>, vector<4x1xf32>
      %cst_11 = arith.constant 3.906250e-03 : f32
      %14 = vector.broadcast %cst_11 : f32 to vector<4x1xf32>
      %15 = arith.mulf %13, %14 : vector<4x1xf32>
      %c0_12 = arith.constant 0 : index
      %c0_13 = arith.constant 0 : index
      %c0_14 = arith.constant 0 : index
      %16 = vector.load %arg3[%c0_12, %c0_13, %c0_14] : memref<1x4x1xf32, #tpu.memory_space<vmem>>, vector<1x4x1xf32>
      %17 = vector.shape_cast %16 : vector<1x4x1xf32> to vector<4x1xf32>
      %18 = vector.shape_cast %15 : vector<4x1xf32> to vector<1x4x1xf32>
      tpu.vector_store %arg3[%c0_12, %c0_13, %c0_14], %18 {strides = array<i32>} : memref<1x4x1xf32, #tpu.memory_space<vmem>>, vector<1x4x1xf32>,
    } else {
    }
    return
  }
  func.func @transform_0(%arg0: i32, %arg1: i32) -> (i32, i32, i32) {
    %c0_i32 = arith.constant 0 : i32
    %c0_i32_0 = arith.constant 0 : i32
    return %arg0, %c0_i32, %arg1 : i32, i32, i32
  }
  func.func @transform_1(%arg0: i32, %arg1: i32) -> (i32, i32, i32) {
    %c0_i32 = arith.constant 0 : i32
    %c0_i32_0 = arith.constant 0 : i32
    %c0_i32_1 = arith.constant 0 : i32
    return %arg0, %c0_i32, %c0_i32_0 : i32, i32, i32
  }
}

</mosaic_0001>

<llo_original>
// kernel: global_avg_pool2d.1
$region0: #{global_avg_pool2d.1}
  #allocation0 [shape = 'u32[]', space=smem, size = 0x4, offset = 0x4, fixed_abs, tag = 'smem constant byte address 0x4 - core index']
  #allocation1 [shape = 'u32[72,128]{1,0:T(1,128)}', space=vmem, size = 0x9000, scoped, tag = 'internal scratch']
  #allocation2 [shape = 'f32[4,1]{1,0:T(4,128)}', space=vmem, size = 0x800, scoped, tag = 'scratch operand']
  %s0 = inlined_call_operand.vmem [shape: f32[2,4,256], index: 0, kind: input, shape index: {}]
  %s1 = inlined_call_operand.vmem [shape: f32[2,4,1], index: 1, kind: output, shape index: {}]
  %s2 = sld [smem:[#allocation0]]
  $region45: #{global_avg_pool2d.1} parent=0
    _
  %s4 = ssub.s32 1, %s2
  %s5 = scalar_select 0, %s4, %s2
  loop: start=0, step=1, limit=4
  $region2: #{global_avg_pool2d.1} parent=0 // loop_pre_header
    _
  $region3: #{global_avg_pool2d.1} parent=0 // loop_header
    %s7 = sphi 0, %s11
    %p8 = scmp.ge.s32.totalorder %s7, 4
    %s14 = sphi 0, %s26
    %s15 = sphi 0, %s22
    %s16 = sphi 0, %s14
    %s17 = sphi 0, %s15
    %s18 = sphi 0, %s16
    %s19 = sphi 0, %s17
    %s31 = sphi 0, %s33
    %s34 = sphi 0, %s31
    %s35 = sphi 0, %s34
    %s51 = sphi 0, %s35
    %s57 = sphi 0, %s59
    %s60 = sphi 0, %s57
    %s61 = sphi 0, %s60
    %s77 = sphi 0, %s61
  $region4: #{global_avg_pool2d.1} parent=0 // loop_header_branch
    %10 = sbr.rel (%p8) target = $region8
  $region5: #{global_avg_pool2d.1} parent=0 // loop_body
    %s12 = ssub.s32 %s7, 1
    %s13 = ssub.s32 %s7, 2
    %s20 = sadd.s32 1, %s15
    %p21 = scmp.ge.s32.totalorder %s20, 1
    %s22 = scalar_select %p21, 0, %s20
    %s23 = sadd.s32 1, %s14
    %s24 = scalar_select %p21, %s23, %s14
    %p25 = scmp.ge.s32.totalorder %s24, 2
    %s26 = scalar_select %p25, 0, %s24
    %s27 = ssub.s32 %s14, %s26
    %s28 = ssub.s32 %s15, %s22
    %s29 = sor.u32 %s27, %s28
    %p30 = scmp.eq.s32.totalorder %s29, 0
    %s32 = sadd.s32 %s31, 1
    %s33 = scalar_select %p30, %s31, %s32
    %p36 = pneg %p30
    %p37 = scmp.eq.s32.totalorder %s7, 1
    %p38 = por %p36, %p37
    %p39 = scmp.ne.s32.totalorder %s31, %s34
    %p40 = scmp.eq.s32.totalorder %s7, 0
    %p41 = por %p39, %p40
    %p42 = scmp.ne.s32.totalorder %s31, %s34
    %p43 = scmp.eq.s32.totalorder %s12, 1
    %p44 = por %p42, %p43
    %p45 = scmp.ne.s32.totalorder %s34, %s35
    %p46 = scmp.eq.s32.totalorder %s12, 0
    %p47 = por %p45, %p46
    %p48 = scmp.ne.s32.totalorder %s34, %s35
    %p49 = scmp.eq.s32.totalorder %s13, 1
    %p50 = por %p48, %p49
    %p52 = scmp.ne.s32.totalorder %s35, %s51
    %p53 = scmp.eq.s32.totalorder %s13, 0
    %p54 = por %p52, %p53
    %s55 = ssub.s32 %s14, %s26
    %p56 = scmp.eq.s32.totalorder %s55, 0
    %s58 = sadd.s32 %s57, 1
    %s59 = scalar_select %p56, %s57, %s58
    %p62 = pneg %p56
    %p63 = scmp.eq.s32.totalorder %s7, 1
    %p64 = por %p62, %p63
    %p65 = scmp.ne.s32.totalorder %s57, %s60
    %p66 = scmp.eq.s32.totalorder %s7, 0
    %p67 = por %p65, %p66
    %p68 = scmp.ne.s32.totalorder %s57, %s60
    %p69 = scmp.eq.s32.totalorder %s12, 1
    %p70 = por %p68, %p69
    %p71 = scmp.ne.s32.totalorder %s60, %s61
    %p72 = scmp.eq.s32.totalorder %s12, 0
    %p73 = por %p71, %p72
    %p74 = scmp.ne.s32.totalorder %s60, %s61
    %p75 = scmp.eq.s32.totalorder %s13, 1
    %p76 = por %p74, %p75
    %p78 = scmp.ne.s32.totalorder %s61, %s77
    %p79 = scmp.eq.s32.totalorder %s13, 0
    %p80 = por %p78, %p79
    %p81 = scmp.le.s32.totalorder 1, %s7
    %p82 = scmp.lt.s32.totalorder %s7, 3
    %p83 = pnand %p81, %p82
    %p84 = pneg %p83
    // Predicated region
    $region9: #{global_avg_pool2d.1} parent=5 // pred_check
      _
    $region10: #{global_avg_pool2d.1} parent=5 // pred_check_branch
      %86 = sbr.rel (%p83) target = $region12
    $region11: #{global_avg_pool2d.1} parent=5 // pred_region
      %s87 = ssub.s32 %s7, 1
    $region12: #{global_avg_pool2d.1} parent=5 // pred_fallthru
      _
    %p88 = scmp.lt.s32.totalorder %s7, 2
    // Predicated region
    $region13: #{global_avg_pool2d.1} parent=5 // pred_check
      %p89 = pneg %p88
    $region14: #{global_avg_pool2d.1} parent=5 // pred_check_branch
      %91 = sbr.rel (%p89) target = $region16
    $region15: #{global_avg_pool2d.1} parent=5 // pred_region
      // Predicated region
      $region17: #{global_avg_pool2d.1} parent=15 // pred_check
        %p92 = pneg %p41
      $region18: #{global_avg_pool2d.1} parent=15 // pred_check_branch
        %94 = sbr.rel (%p92) target = $region20
      $region19: #{global_avg_pool2d.1} parent=15 // pred_region
        %s95 = smul.u32 2, %s15
        %p96 = scmp.lt.s32.totalorder %s14, 1
        %s97 = scalar_select %p96, %s14, 1
        %p98 = scmp.lt.s32.totalorder %s95, 1
        %s99 = scalar_select %p98, %s95, 1
        %s100 = smul.addr %s97, 2
        %s101 = sadd.s32 %s99, %s100
        %s102 = smul.addr %s101, 4
        %s103 = scalar_lea.vmem %s0, %s102
        %s104 = smul.u32 2, %s15
      $region20: #{global_avg_pool2d.1} parent=15 // pred_fallthru
        _
    $region16: #{global_avg_pool2d.1} parent=5 // pred_fallthru
      _
    %p105 = scmp.le.s32.totalorder 1, %s7
    %p106 = scmp.lt.s32.totalorder %s7, 3
    %p107 = pnand %p105, %p106
    %p108 = pneg %p107
    // Predicated region
    $region21: #{global_avg_pool2d.1} parent=5 // pred_check
      _
    $region22: #{global_avg_pool2d.1} parent=5 // pred_check_branch
      %110 = sbr.rel (%p107) target = $region24
    $region23: #{global_avg_pool2d.1} parent=5 // pred_region
      %s111 = ssub.s32 %s7, 1
      %s112 = smul.u32 2, %s17
      %p113 = scmp.lt.s32.totalorder %s16, 1
      %s114 = scalar_select %p113, %s16, 1
      %p115 = scmp.lt.s32.totalorder %s112, 1
      %s116 = scalar_select %p115, %s112, 1
      %s117 = smul.addr %s114, 2
      %s118 = sadd.s32 %s116, %s117
      %s119 = smul.addr %s118, 4
      %s120 = scalar_lea.vmem %s0, %s119
      %p121 = pneg %p47
      %p122 = pneg %p44
      %p123 = pneg %p73
      %p124 = pneg %p70
      %p125 = scmp.lt.s32.totalorder %s16, 1
      %s126 = scalar_select %p125, %s16, 1
      %s127 = smul.addr %s126, 4
      %s128 = scalar_lea.vmem %s1, %s127
      %s129 = smul.u32 2, %s17
      %p130 = scmp.lt.s32.totalorder %s16, 1
      %s131 = scalar_select %p130, %s16, 1
      %p132 = scmp.lt.s32.totalorder %s129, 1
      %s133 = scalar_select %p132, %s129, 1
      %s134 = smul.addr %s131, 2
      %s135 = sadd.s32 %s133, %s134
      %s136 = smul.addr %s135, 4
      %s137 = scalar_lea.vmem %s0, %s136
      %s138 = smul.u32 2, %s17
      %p139 = scmp.lt.s32.totalorder %s16, 1
      %s140 = scalar_select %p139, %s16, 1
      %s141 = smul.addr %s140, 4
      %s142 = scalar_lea.vmem %s1, %s141
      %p143 = scmp.eq.s32.totalorder %s17, 0
      // Predicated region
      $region25: #{global_avg_pool2d.1} parent=23 // pred_check
        %p144 = pneg %p143
      $region26: #{global_avg_pool2d.1} parent=23 // pred_check_branch
        %146 = sbr.rel (%p144) target = $region28
      $region27: #{global_avg_pool2d.1} parent=23 // pred_region
        %vm147 = vcmask 3072
        %148 = vst.msk [vmem:[#allocation2] sm:$0xf] %vm147, 0.0
      $region28: #{global_avg_pool2d.1} parent=23 // pred_fallthru
        _
      %v149 = vld [vmem:[%s137] sm:$0xff]
      %v150 = vld [vmem:[#allocation2] sm:$0xf]
      %152 = vst [vmem:[#allocation1] ss:$2 sm:$0xff] %v149
      %v153 = vld.sshfl [vmem:[#allocation1] sm:$0xff pattern:$0x75316420]
      %v154 = vld.sshfl [vmem:[#allocation1 + $0x8] sm:$0xff pattern:$0x75316420]
      %vm157 = vcmask 1043456
      %v158 = vsel %vm157, %v153, 0.0
      %v159 = vsel %vm157, %v154, 0.0
      %v160 = vadd.f32 %v158, %v159
      %161 = vadd.xlane.f32.xlu0 %v160
      %v162 = vpop.xlane.xlu0 %161
      %v163 = vadd.f32 %v150, %v162
      %vm164 = vcmask 3072
      %165 = vst.msk [vmem:[#allocation2] sm:$0xf] %vm164, %v163
      // Predicated region
      $region29: #{global_avg_pool2d.1} parent=23 // pred_check
        %p166 = pneg %p143
      $region30: #{global_avg_pool2d.1} parent=23 // pred_check_branch
        %168 = sbr.rel (%p166) target = $region32
      $region31: #{global_avg_pool2d.1} parent=23 // pred_region
        %v169 = vld [vmem:[#allocation2] sm:$0xf]
        %v170 = vmul.f32 %v169, 0.00390625
        %171 = vst.msk [vmem:[%s142] sm:$0xf] %vm164, %v170
      $region32: #{global_avg_pool2d.1} parent=23 // pred_fallthru
        _
      %p172 = scmp.lt.s32.totalorder %s16, 1
      %s173 = scalar_select %p172, %s16, 1
      %s174 = smul.addr %s173, 4
      %s175 = scalar_lea.vmem %s1, %s174
      // Predicated region
      $region33: #{global_avg_pool2d.1} parent=23 // pred_check
        %p176 = pneg %p70
      $region34: #{global_avg_pool2d.1} parent=23 // pred_check_branch
        %178 = sbr.rel (%p176) target = $region36
      $region35: #{global_avg_pool2d.1} parent=23 // pred_region
        _
      $region36: #{global_avg_pool2d.1} parent=23 // pred_fallthru
        _
    $region24: #{global_avg_pool2d.1} parent=5 // pred_fallthru
      _
    %p179 = scmp.le.s32.totalorder 2, %s7
    // Predicated region
    $region37: #{global_avg_pool2d.1} parent=5 // pred_check
      %p180 = pneg %p179
    $region38: #{global_avg_pool2d.1} parent=5 // pred_check_branch
      %182 = sbr.rel (%p180) target = $region40
    $region39: #{global_avg_pool2d.1} parent=5 // pred_region
      %s183 = ssub.s32 %s7, 2
      // Predicated region
      $region41: #{global_avg_pool2d.1} parent=39 // pred_check
        %p184 = pneg %p76
      $region42: #{global_avg_pool2d.1} parent=39 // pred_check_branch
        %186 = sbr.rel (%p184) target = $region44
      $region43: #{global_avg_pool2d.1} parent=39 // pred_region
        %p187 = scmp.lt.s32.totalorder %s18, 1
        %s188 = scalar_select %p187, %s18, 1
        %s189 = smul.addr %s188, 4
        %s190 = scalar_lea.vmem %s1, %s189
      $region44: #{global_avg_pool2d.1} parent=39 // pred_fallthru
        _
    $region40: #{global_avg_pool2d.1} parent=5 // pred_fallthru
      _
  $region6: #{global_avg_pool2d.1} parent=0 // loop_footer
    %s11 = sadd.s32 1, %s7
  $region7: #{global_avg_pool2d.1} parent=0 // loop_footer_branch
    %6 = sbr.rel target = $region3
  $region8: #{global_avg_pool2d.1} parent=0 // loop_exit
    _

</llo_original>
